<compile_context>
chip_gen: v7x
topology: tpu7x:2x2x1
jax: 0.10.0
libtpu: 0.0.40
codegen_flags: <defaults>
</compile_context>

<pallas_src>
import numpy as np
import jax
import jax.numpy as jnp
from jax import lax
from jax.experimental import pallas as pl
from jax.experimental.pallas import tpu as pltpu

_MIB = 1024 * 1024


def _sublane_align(dtype) -> int:
    """Min second-to-last-dim tile for packed dtypes: (8,128) f32, (16,128) bf16, (32,128) int8/fp8."""
    return {4: 8, 2: 16, 1: 32}.get(np.dtype(dtype).itemsize, 8)


def _vmem_capacity_bytes() -> int:
    """Per-core VMEM capacity; conservative v7x-sized (64 MiB) fallback if the query fails."""
    try:
        info = pltpu.get_tpu_info()
        cap = getattr(info, "vmem_capacity_bytes", None)
        if cap:
            return int(cap)
    except Exception:
        pass
    return 64 * _MIB


def _tile_and_pad(dim, max_tile, align):
    """Pick a tile <= max_tile (multiple of `align`) plus the padded extent it tiles.

    Small dims use a full-extent block (always legal, no padding).  Large dims
    prefer an exact divisor near max_tile; otherwise the dim is padded up to the
    next tile multiple so an oversized fallback block can never blow the VMEM
    budget or collapse a grid axis to 1."""
    if dim <= max_tile:
        return dim, dim
    cap = max(align, (max_tile // align) * align)
    t = cap
    while t >= max(align, cap // 2):
        if dim % t == 0:
            return t, dim
        t -= align
    padded = ((dim + cap - 1) // cap) * cap
    return cap, padded


def _matmul_kernel_f32(x_ref, w_ref, o_ref):
    # Output block is resident across the reduction axis -> accumulate in place.
    k = pl.program_id(2)
    partial = lax.dot_general(
        x_ref[...],                      # (tm, tk)
        w_ref[...],                      # (tn, tk)  -- native nn.Linear layout
        dimension_numbers=(((1,), (1,)), ((), ())),   # contract last dims (trans_b)
        preferred_element_type=jnp.float32,
    )

    @pl.when(k == 0)
    def _():
        o_ref[...] = partial             # first step: write, don't zero-then-add

    @pl.when(k > 0)
    def _():
        o_ref[...] += partial


def _matmul_kernel_lowp(x_ref, w_ref, o_ref, acc_ref):
    # Low-precision output dtype: f32 VMEM accumulator, single cast at the end.
    k = pl.program_id(2)
    partial = lax.dot_general(
        x_ref[...],
        w_ref[...],
        dimension_numbers=(((1,), (1,)), ((), ())),
        preferred_element_type=jnp.float32,
    )

    @pl.when(k == 0)
    def _():
        acc_ref[...] = partial

    @pl.when(k > 0)
    def _():
        acc_ref[...] += partial

    @pl.when(k == pl.num_programs(2) - 1)
    def _():
        o_ref[...] = acc_ref[...].astype(o_ref.dtype)


def unpack_linear(inputs, weight, *, max_tm=512, max_tn=512, max_tk=2048,
                  compute_dtype=None):
    """
    inputs: list/tuple of (B, F) arrays (the UnpackLinear *inputs), OR a single
            pre-concatenated (B, K) array (skips the wrapper concat / its HBM
            round trip for large B).
    weight: (O, K) torch.nn.Linear.weight layout (K = num_inputs * F), bias=False.
    compute_dtype: optionally cast x/W (e.g. jnp.bfloat16 on v5e) before the
            matmul; the output keeps the original input dtype.
    returns: (B, O) == concat(inputs, axis=1) @ weight.T
    """
    if isinstance(inputs, (list, tuple)):
        x = inputs[0] if len(inputs) == 1 else jnp.concatenate(inputs, axis=1)
    else:
        x = inputs
    B, K = x.shape
    O, Kw = weight.shape
    assert Kw == K, f"weight K={Kw} != concat K={K}"

    out_dtype = x.dtype
    w = weight
    if compute_dtype is not None:
        x = x.astype(compute_dtype)
    if w.dtype != x.dtype:
        # Avoid silent mixed-dtype promotion inside the kernel.
        w = w.astype(x.dtype)

    in_bytes = np.dtype(x.dtype).itemsize
    out_bytes = np.dtype(out_dtype).itemsize
    needs_acc = out_dtype != jnp.float32
    sub = max(_sublane_align(x.dtype), _sublane_align(out_dtype))

    cap = _vmem_capacity_bytes()
    budget = int(cap * 0.70)             # double-buffered tile footprint target

    def footprint(tm, tn, tk):
        fb = 2 * (tm * tk + tn * tk) * in_bytes + 2 * tm * tn * out_bytes
        if needs_acc:
            fb += tm * tn * 4
        return fb

    # Shrink tiles (tk first, then tn, then tm) until the double-buffered
    # footprint fits the per-generation VMEM budget.
    tm_cap, tn_cap, tk_cap = max_tm, max_tn, max_tk
    while True:
        tm, Bp = _tile_and_pad(B, tm_cap, sub)
        tn, Op = _tile_and_pad(O, tn_cap, 128)
        tk, Kp = _tile_and_pad(K, tk_cap, 128)
        if footprint(tm, tn, tk) <= budget:
            break
        if tk_cap > 512:
            tk_cap //= 2
        elif tn_cap > 256:
            tn_cap //= 2
        elif tm_cap > 256:
            tm_cap //= 2
        elif tk_cap > 128:
            tk_cap //= 2
        else:
            break                         # tiles already tiny; accept

    # v7x has 2 TensorCores: if the batch axis yields a single parallel block,
    # split the output-feature axis so both cores get work.
    if Bp // tm == 1 and Op // tn == 1 and tn > 128:
        tn = max(128, ((tn // 2) // 128) * 128)
        Op = ((O + tn - 1) // tn) * tn

    if (Bp, Kp) != (B, K):
        x = jnp.pad(x, ((0, Bp - B), (0, Kp - K)))
    if (Op, Kp) != (O, K):
        w = jnp.pad(w, ((0, Op - O), (0, Kp - K)))

    grid = (Bp // tm, Op // tn, Kp // tk)
    kernel = _matmul_kernel_lowp if needs_acc else _matmul_kernel_f32
    scratch = [pltpu.VMEM((tm, tn), jnp.float32)] if needs_acc else []

    vmem_limit = int(min(cap - 4 * _MIB,
                         max(footprint(tm, tn, tk) + 8 * _MIB, 32 * _MIB)))

    out = pl.pallas_call(
        kernel,
        out_shape=jax.ShapeDtypeStruct((Bp, Op), out_dtype),
        grid_spec=pltpu.PrefetchScalarGridSpec(
            num_scalar_prefetch=0,
            grid=grid,
            in_specs=[
                pl.BlockSpec((tm, tk), lambda i, j, k: (i, k)),   # x tile
                pl.BlockSpec((tn, tk), lambda i, j, k: (j, k)),   # W tile (no transpose)
            ],
            out_specs=pl.BlockSpec((tm, tn), lambda i, j, k: (i, j)),
            scratch_shapes=scratch,
        ),
        compiler_params=pltpu.CompilerParams(
            # Two parallel axes -> megacore sharding on v7x; K reduction stays
            # last and "arbitrary" (output block resident across it).
            dimension_semantics=("parallel", "parallel", "arbitrary"),
            vmem_limit_bytes=vmem_limit,
        ),
        cost_estimate=pl.CostEstimate(
            flops=2 * B * O * K,
            transcendentals=0,
            bytes_accessed=B * K * in_bytes + O * K * in_bytes + B * O * out_bytes,
        ),
    )(x, w)

    if (Bp, Op) != (B, O):
        out = out[:B, :O]
    return out


if __name__ == "__main__":
    # Small shapes consistent with the module's forward:
    #   num_inputs inputs of shape (batch, in_features), nn.Linear weight
    #   (out_features, num_inputs * in_features), no bias.
    batch, in_features, out_features, num_inputs = 8, 128, 128, 3

    key = jax.random.PRNGKey(0)
    k_w, *k_xs = jax.random.split(key, 1 + num_inputs)
    weight = (
        jax.random.normal(
            k_w, (out_features, in_features * num_inputs), dtype=jnp.float32
        )
        * 0.05
    )
    inputs = [
        jax.random.normal(k, (batch, in_features), dtype=jnp.float32)
        for k in k_xs
    ]

    out = jax.block_until_ready(unpack_linear(inputs, weight))
    ref = jnp.concatenate(inputs, axis=1) @ weight.T
    assert out.shape == (batch, out_features)
    assert jnp.allclose(out, ref, atol=1e-4, rtol=1e-4), float(
        jnp.max(jnp.abs(out - ref))
    )

    # Second check: exercise the tiled / padded / multi-K-step path with
    # non-divisible output features and small tile caps.
    b2, o2 = 24, 320
    kx2 = jax.random.split(jax.random.PRNGKey(1), num_inputs)
    inputs2 = [
        jax.random.normal(k, (b2, in_features), dtype=jnp.float32) for k in kx2
    ]
    weight2 = (
        jax.random.normal(
            jax.random.PRNGKey(2), (o2, in_features * num_inputs), dtype=jnp.float32
        )
        * 0.05
    )
    out2 = jax.block_until_ready(
        unpack_linear(inputs2, weight2, max_tm=16, max_tn=128, max_tk=128)
    )
    ref2 = jnp.concatenate(inputs2, axis=1) @ weight2.T
    assert out2.shape == (b2, o2)
    assert jnp.allclose(out2, ref2, atol=1e-4, rtol=1e-4), float(
        jnp.max(jnp.abs(out2 - ref2))
    )

    print("KERNEL_OK")
</pallas_src>

<mosaic_0001>
module attributes {stable_mosaic.version = 11 : i64} {
  func.func @_matmul_kernel_f32(%arg0: i32, %arg1: i32, %arg2: i32, %arg3: memref<8x384xf32, #tpu.memory_space<vmem>>, %arg4: memref<128x384xf32, #tpu.memory_space<vmem>>, %arg5: memref<8x128xf32, #tpu.memory_space<vmem>>) attributes {dimension_semantics = [#tpu.dimension_semantics<parallel>, #tpu.dimension_semantics<parallel>, #tpu.dimension_semantics<arbitrary>], iteration_bounds = array<i64: 1, 1, 1>, scalar_prefetch = 0 : i64, scratch_operands = 0 : i64, tpu.core_type = #tpu.core_type<tc>, window_params = [{transform_indices = @transform_0, window_bounds = array<i64: 8, 384>}, {transform_indices = @transform_1, window_bounds = array<i64: 128, 384>}, {transform_indices = @transform_2, window_bounds = array<i64: 8, 128>}]} {
    %c0 = arith.constant 0 : index
    %c0_0 = arith.constant 0 : index
    %0 = vector.load %arg3[%c0, %c0_0] : memref<8x384xf32, #tpu.memory_space<vmem>>, vector<8x384xf32>
    %c0_1 = arith.constant 0 : index
    %c0_2 = arith.constant 0 : index
    %1 = vector.load %arg4[%c0_1, %c0_2] : memref<128x384xf32, #tpu.memory_space<vmem>>, vector<128x384xf32>
    %cst = arith.constant dense<0.000000e+00> : vector<8x128xf32>
    %2 = tpu.matmul %0, %1, %cst {dimension_numbers = #tpu.dot_dimension_numbers<[1], [1], [0], [0], [0, 0, 1, 0], [], []>} : vector<8x384xf32>, vector<128x384xf32>, vector<8x128xf32> -> vector<8x128xf32>
    %c0_i32 = arith.constant 0 : i32
    %3 = arith.cmpi eq, %arg2, %c0_i32 : i32
    %4 = arith.extui %3 : i1 to i32
    %c0_i32_3 = arith.constant 0 : i32
    %5 = arith.cmpi ne, %4, %c0_i32_3 : i32
    scf.if %5 {
      %c0_6 = arith.constant 0 : index
      %c0_7 = arith.constant 0 : index
      %9 = vector.load %arg5[%c0_6, %c0_7] : memref<8x128xf32, #tpu.memory_space<vmem>>, vector<8x128xf32>
      tpu.vector_store %arg5[%c0_6, %c0_7], %2 {strides = array<i32>} : memref<8x128xf32, #tpu.memory_space<vmem>>, vector<8x128xf32>,
    } else {
    }
    %c0_i32_4 = arith.constant 0 : i32
    %6 = arith.cmpi sgt, %arg2, %c0_i32_4 : i32
    %7 = arith.extui %6 : i1 to i32
    %c0_i32_5 = arith.constant 0 : i32
    %8 = arith.cmpi ne, %7, %c0_i32_5 : i32
    scf.if %8 {
      %c0_6 = arith.constant 0 : index
      %c0_7 = arith.constant 0 : index
      %9 = vector.load %arg5[%c0_6, %c0_7] : memref<8x128xf32, #tpu.memory_space<vmem>>, vector<8x128xf32>
      %10 = arith.addf %9, %2 : vector<8x128xf32>
      %c0_8 = arith.constant 0 : index
      %c0_9 = arith.constant 0 : index
      %11 = vector.load %arg5[%c0_8, %c0_9] : memref<8x128xf32, #tpu.memory_space<vmem>>, vector<8x128xf32>
      tpu.vector_store %arg5[%c0_8, %c0_9], %10 {strides = array<i32>} : memref<8x128xf32, #tpu.memory_space<vmem>>, vector<8x128xf32>,
    } else {
    }
    return
  }
  func.func @transform_0(%arg0: i32, %arg1: i32, %arg2: i32) -> (i32, i32) {
    %c0_i32 = arith.constant 0 : i32
    return %arg0, %arg2 : i32, i32
  }
  func.func @transform_1(%arg0: i32, %arg1: i32, %arg2: i32) -> (i32, i32) {
    %c0_i32 = arith.constant 0 : i32
    return %arg1, %arg2 : i32, i32
  }
  func.func @transform_2(%arg0: i32, %arg1: i32, %arg2: i32) -> (i32, i32) {
    %c0_i32 = arith.constant 0 : i32
    return %arg0, %arg1 : i32, i32
  }
}

</mosaic_0001>

<llo_original>
// kernel: tpu_custom_call.1
$region0: #{tpu_custom_call.1}
  #allocation0 [shape = 'u32[]', space=smem, size = 0x4, offset = 0x4, fixed_abs, tag = 'smem constant byte address 0x4 - core index']
  #allocation1 [shape = 'u32[144,128]{1,0:T(1,128)}', space=vmem, size = 0x12000, scoped, tag = 'internal scratch']
  %s0 = inlined_call_operand.hbm [shape: f32[8,384], index: 0, kind: input, shape index: {}]
  %s1 = inlined_call_operand.hbm [shape: f32[128,384], index: 1, kind: input, shape index: {}]
  %s2 = inlined_call_operand.hbm [shape: f32[8,128], index: 2, kind: output, shape index: {}]
  %s3 = sld [smem:[#allocation0]]
  $region34: #{tpu_custom_call.1} parent=0
    _
  %s5 = ssub.s32 1, %s3
  %s6 = scalar_select 0, %s5, %s3
  $region1: #{tpu_custom_call.1} parent=0
    #allocation2 [shape = 'u8[12288]{0}', space=vmem, size = 0x3000, scoped, tag = 'input window, operand 0, single buffered']
    #allocation3 [shape = 's32[1]{0}', space=sflag, size = 0x4, scoped, tag = 'scoped memory for tpu_custom_call.1']
    #allocation4 [shape = 's32[1]{0}', space=sflag, size = 0x4, scoped, tag = 'scoped memory for tpu_custom_call.1']
    #allocation5 [shape = 'u8[196608]{0}', space=vmem, size = 0x30000, scoped, tag = 'input window, operand 1, single buffered']
    #allocation6 [shape = 's32[1]{0}', space=sflag, size = 0x4, scoped, tag = 'scoped memory for tpu_custom_call.1']
    #allocation7 [shape = 'u8[4096]{0}', space=vmem, size = 0x1000, scoped, tag = 'output window, operand 0, single buffered']
    %7 = vsyncpa [#allocation3], 0
    %8 = vsyncpa [#allocation6], 0
    %9 = vsyncpa [#allocation4], 0
    // Predicated region
    $region2: #{tpu_custom_call.1} parent=1 // pred_check
      _
    $region3: #{tpu_custom_call.1} parent=1 // pred_check_branch
      %11 = sbr.rel (0) target = $region5
    $region4: #{tpu_custom_call.1} parent=1 // pred_region
      %s13 = ssub.s32 384, 384
      %14 = vsyncadd [#allocation3], %s13
      %s16 = sshll.u32 [#allocation2], 4
      %s17 = int_to_ptr.vmem [resolvable:$true] %s16
      %19 = dma.hbm_to_vmem [thread:$0]  %s0, 384, %s17, [#allocation3]
    $region5: #{tpu_custom_call.1} parent=1 // pred_fallthru
      _
    // Predicated region
    $region6: #{tpu_custom_call.1} parent=1 // pred_check
      _
    $region7: #{tpu_custom_call.1} parent=1 // pred_check_branch
      %21 = sbr.rel (0) target = $region9
    $region8: #{tpu_custom_call.1} parent=1 // pred_region
      %s23 = ssub.s32 6144, 6144
      %24 = vsyncadd [#allocation6], %s23
      %s25 = sshll.u32 [#allocation5], 4
      %s26 = int_to_ptr.vmem [resolvable:$true] %s25
      %31 = dma.hbm_to_vmem [thread:$0]  %s1, 6144, %s26, [#allocation6], 384, 384, 24
    $region9: #{tpu_custom_call.1} parent=1 // pred_fallthru
      _
    // Predicated region
    $region10: #{tpu_custom_call.1} parent=1 // pred_check
      _
    $region11: #{tpu_custom_call.1} parent=1 // pred_check_branch
      %33 = sbr.rel (0) target = $region13
    $region12: #{tpu_custom_call.1} parent=1 // pred_region
      %34 = dma.done [#allocation3], 384
    $region13: #{tpu_custom_call.1} parent=1 // pred_fallthru
      _
    // Predicated region
    $region14: #{tpu_custom_call.1} parent=1 // pred_check
      _
    $region15: #{tpu_custom_call.1} parent=1 // pred_check_branch
      %36 = sbr.rel (0) target = $region17
    $region16: #{tpu_custom_call.1} parent=1 // pred_region
      %37 = dma.done [#allocation6], 6144
    $region17: #{tpu_custom_call.1} parent=1 // pred_fallthru
      _
    %v38 = vld [vmem:[#allocation2] sm:$0xff]
    %v39 = vld [vmem:[#allocation2 + $0x8] sm:$0xff]
    %v40 = vld [vmem:[#allocation2 + $0x10] sm:$0xff]
    %v41 = vld [vmem:[#allocation5] sm:$0xff]
    %v42 = vld [vmem:[#allocation5 + $0x8] sm:$0xff]
    %v43 = vld [vmem:[#allocation5 + $0x10] sm:$0xff]
    %v44 = vld [vmem:[#allocation5 + $0x18] sm:$0xff]
    %v45 = vld [vmem:[#allocation5 + $0x20] sm:$0xff]
    %v46 = vld [vmem:[#allocation5 + $0x28] sm:$0xff]
    %v47 = vld [vmem:[#allocation5 + $0x30] sm:$0xff]
    %v48 = vld [vmem:[#allocation5 + $0x38] sm:$0xff]
    %v49 = vld [vmem:[#allocation5 + $0x40] sm:$0xff]
    %v50 = vld [vmem:[#allocation5 + $0x48] sm:$0xff]
    %v51 = vld [vmem:[#allocation5 + $0x50] sm:$0xff]
    %v52 = vld [vmem:[#allocation5 + $0x58] sm:$0xff]
    %v53 = vld [vmem:[#allocation5 + $0x60] sm:$0xff]
    %v54 = vld [vmem:[#allocation5 + $0x68] sm:$0xff]
    %v55 = vld [vmem:[#allocation5 + $0x70] sm:$0xff]
    %v56 = vld [vmem:[#allocation5 + $0x78] sm:$0xff]
    %v57 = vld [vmem:[#allocation5 + $0x80] sm:$0xff]
    %v58 = vld [vmem:[#allocation5 + $0x88] sm:$0xff]
    %v59 = vld [vmem:[#allocation5 + $0x90] sm:$0xff]
    %v60 = vld [vmem:[#allocation5 + $0x98] sm:$0xff]
    %v61 = vld [vmem:[#allocation5 + $0xa0] sm:$0xff]
    %v62 = vld [vmem:[#allocation5 + $0xa8] sm:$0xff]
    %v63 = vld [vmem:[#allocation5 + $0xb0] sm:$0xff]
    %v64 = vld [vmem:[#allocation5 + $0xb8] sm:$0xff]
    %v65 = vld [vmem:[#allocation5 + $0xc0] sm:$0xff]
    %v66 = vld [vmem:[#allocation5 + $0xc8] sm:$0xff]
    %v67 = vld [vmem:[#allocation5 + $0xd0] sm:$0xff]
    %v68 = vld [vmem:[#allocation5 + $0xd8] sm:$0xff]
    %v69 = vld [vmem:[#allocation5 + $0xe0] sm:$0xff]
    %v70 = vld [vmem:[#allocation5 + $0xe8] sm:$0xff]
    %v71 = vld [vmem:[#allocation5 + $0xf0] sm:$0xff]
    %v72 = vld [vmem:[#allocation5 + $0xf8] sm:$0xff]
    %v73 = vld [vmem:[#allocation5 + $0x100] sm:$0xff]
    %v74 = vld [vmem:[#allocation5 + $0x108] sm:$0xff]
    %v75 = vld [vmem:[#allocation5 + $0x110] sm:$0xff]
    %v76 = vld [vmem:[#allocation5 + $0x118] sm:$0xff]
    %v77 = vld [vmem:[#allocation5 + $0x120] sm:$0xff]
    %v78 = vld [vmem:[#allocation5 + $0x128] sm:$0xff]
    %v79 = vld [vmem:[#allocation5 + $0x130] sm:$0xff]
    %v80 = vld [vmem:[#allocation5 + $0x138] sm:$0xff]
    %v81 = vld [vmem:[#allocation5 + $0x140] sm:$0xff]
    %v82 = vld [vmem:[#allocation5 + $0x148] sm:$0xff]
    %v83 = vld [vmem:[#allocation5 + $0x150] sm:$0xff]
    %v84 = vld [vmem:[#allocation5 + $0x158] sm:$0xff]
    %v85 = vld [vmem:[#allocation5 + $0x160] sm:$0xff]
    %v86 = vld [vmem:[#allocation5 + $0x168] sm:$0xff]
    %v87 = vld [vmem:[#allocation5 + $0x170] sm:$0xff]
    %v88 = vld [vmem:[#allocation5 + $0x178] sm:$0xff]
    %89 = vmatprep.subr.mxu0 %v42
    %90 = vmatpush1.xpose.msra.mxu0 %v41
    %91 = vmatprep.subr.mxu0 %v45
    %92 = vmatpush1.xpose.msra.mxu0 %v44
    %93 = vmatprep.subr.mxu0 %v48
    %94 = vmatpush1.xpose.msra.mxu0 %v47
    %95 = vmatprep.subr.mxu0 %v51
    %96 = vmatpush1.xpose.msra.mxu0 %v50
    %97 = vmatprep.subr.mxu0 %v54
    %98 = vmatpush1.xpose.msra.mxu0 %v53
    %99 = vmatprep.subr.mxu0 %v57
    %100 = vmatpush1.xpose.msra.mxu0 %v56
    %101 = vmatprep.subr.mxu0 %v60
    %102 = vmatpush1.xpose.msra.mxu0 %v59
    %103 = vmatprep.subr.mxu0 %v63
    %104 = vmatpush1.xpose.msra.mxu0 %v62
    %105 = vmatprep.subr.mxu0 %v66
    %106 = vmatpush1.xpose.msra.mxu0 %v65
    %107 = vmatprep.subr.mxu0 %v69
    %108 = vmatpush1.xpose.msra.mxu0 %v68
    %109 = vmatprep.subr.mxu0 %v72
    %110 = vmatpush1.xpose.msra.mxu0 %v71
    %111 = vmatprep.subr.mxu0 %v75
    %112 = vmatpush1.xpose.msra.mxu0 %v74
    %113 = vmatprep.subr.mxu0 %v78
    %114 = vmatpush1.xpose.msra.mxu0 %v77
    %115 = vmatprep.subr.mxu0 %v81
    %116 = vmatpush1.xpose.msra.mxu0 %v80
    %117 = vmatprep.subr.mxu0 %v84
    %118 = vmatpush1.xpose.msra.mxu0 %v83
    %119 = vmatprep.subr.mxu0 %v87
    %120 = vmatpush1.xpose.msra.mxu0 %v86
    %121 = vmatprep.subr.mxu0 0.0
    %122 = vmatpush1.xpose.msra.mxu0 0.0
    %123 = vmatprep.subr.mxu0 0.0
    %124 = vmatpush1.xpose.msra.mxu0 0.0
    %125 = vmatprep.subr.mxu0 0.0
    %126 = vmatpush1.xpose.msra.mxu0 0.0
    %127 = vmatprep.subr.mxu0 0.0
    %128 = vmatpush1.xpose.msra.mxu0 0.0
    %129 = vmatprep.subr.mxu0 0.0
    %130 = vmatpush1.xpose.msra.mxu0 0.0
    %131 = vmatprep.subr.mxu0 0.0
    %132 = vmatpush1.xpose.msra.mxu0 0.0
    %133 = vmatprep.subr.mxu0 0.0
    %134 = vmatpush1.xpose.msra.mxu0 0.0
    %135 = vmatprep.subr.mxu0 0.0
    %136 = vmatpush1.xpose.msra.mxu0 0.0
    %137 = vmatprep.subr.mxu0 0.0
    %138 = vmatpush1.xpose.msra.mxu0 0.0
    %139 = vmatprep.subr.mxu0 0.0
    %140 = vmatpush1.xpose.msra.mxu0 0.0
    %141 = vmatprep.subr.mxu0 0.0
    %142 = vmatpush1.xpose.msra.mxu0 0.0
    %143 = vmatprep.subr.mxu0 0.0
    %144 = vmatpush1.xpose.msra.mxu0 0.0
    %145 = vmatprep.subr.mxu0 0.0
    %146 = vmatpush1.xpose.msra.mxu0 0.0
    %147 = vmatprep.subr.mxu0 0.0
    %148 = vmatpush1.xpose.msra.mxu0 0.0
    %149 = vmatprep.subr.mxu0 0.0
    %150 = vmatpush1.xpose.msra.mxu0 0.0
    %151 = vmatprep.subr.mxu0 0.0
    %152 = vmatpush1.xpose.msra.mxu0 0.0
    %153 = vmatprep.mubr.f32.mxu0 %v39
    %154 = vmatmul.mubr.f32.gmra.mrb[0].mxu0 %v38
    %v155 = vpop.f32.mrb[0].mxu0
    %v156 = vadd.f32 0.0, %v155
    %v157 = vpop.f32.mrb[0].mxu0
    %158 = vdwg.mxu0
    %159 = vmatprep.subr.mxu0 0.0
    %160 = vmatpush1.xpose.msra.mxu0 %v43
    %161 = vmatprep.subr.mxu0 0.0
    %162 = vmatpush1.xpose.msra.mxu0 %v46
    %163 = vmatprep.subr.mxu0 0.0
    %164 = vmatpush1.xpose.msra.mxu0 %v49
    %165 = vmatprep.subr.mxu0 0.0
    %166 = vmatpush1.xpose.msra.mxu0 %v52
    %167 = vmatprep.subr.mxu0 0.0
    %168 = vmatpush1.xpose.msra.mxu0 %v55
    %169 = vmatprep.subr.mxu0 0.0
    %170 = vmatpush1.xpose.msra.mxu0 %v58
    %171 = vmatprep.subr.mxu0 0.0
    %172 = vmatpush1.xpose.msra.mxu0 %v61
    %173 = vmatprep.subr.mxu0 0.0
    %174 = vmatpush1.xpose.msra.mxu0 %v64
    %175 = vmatprep.subr.mxu0 0.0
    %176 = vmatpush1.xpose.msra.mxu0 %v67
    %177 = vmatprep.subr.mxu0 0.0
    %178 = vmatpush1.xpose.msra.mxu0 %v70
    %179 = vmatprep.subr.mxu0 0.0
    %180 = vmatpush1.xpose.msra.mxu0 %v73
    %181 = vmatprep.subr.mxu0 0.0
    %182 = vmatpush1.xpose.msra.mxu0 %v76
    %183 = vmatprep.subr.mxu0 0.0
    %184 = vmatpush1.xpose.msra.mxu0 %v79
    %185 = vmatprep.subr.mxu0 0.0
    %186 = vmatpush1.xpose.msra.mxu0 %v82
    %187 = vmatprep.subr.mxu0 0.0
    %188 = vmatpush1.xpose.msra.mxu0 %v85
    %189 = vmatprep.subr.mxu0 0.0
    %190 = vmatpush1.xpose.msra.mxu0 %v88
    %191 = vmatprep.subr.mxu0 0.0
    %192 = vmatpush1.xpose.msra.mxu0 0.0
    %193 = vmatprep.subr.mxu0 0.0
    %194 = vmatpush1.xpose.msra.mxu0 0.0
    %195 = vmatprep.subr.mxu0 0.0
    %196 = vmatpush1.xpose.msra.mxu0 0.0
    %197 = vmatprep.subr.mxu0 0.0
    %198 = vmatpush1.xpose.msra.mxu0 0.0
    %199 = vmatprep.subr.mxu0 0.0
    %200 = vmatpush1.xpose.msra.mxu0 0.0
    %201 = vmatprep.subr.mxu0 0.0
    %202 = vmatpush1.xpose.msra.mxu0 0.0
    %203 = vmatprep.subr.mxu0 0.0
    %204 = vmatpush1.xpose.msra.mxu0 0.0
    %205 = vmatprep.subr.mxu0 0.0
    %206 = vmatpush1.xpose.msra.mxu0 0.0
    %207 = vmatprep.subr.mxu0 0.0
    %208 = vmatpush1.xpose.msra.mxu0 0.0
    %209 = vmatprep.subr.mxu0 0.0
    %210 = vmatpush1.xpose.msra.mxu0 0.0
    %211 = vmatprep.subr.mxu0 0.0
    %212 = vmatpush1.xpose.msra.mxu0 0.0
    %213 = vmatprep.subr.mxu0 0.0
    %214 = vmatpush1.xpose.msra.mxu0 0.0
    %215 = vmatprep.subr.mxu0 0.0
    %216 = vmatpush1.xpose.msra.mxu0 0.0
    %217 = vmatprep.subr.mxu0 0.0
    %218 = vmatpush1.xpose.msra.mxu0 0.0
    %219 = vmatprep.subr.mxu0 0.0
    %220 = vmatpush1.xpose.msra.mxu0 0.0
    %221 = vmatprep.subr.mxu0 0.0
    %222 = vmatpush1.xpose.msra.mxu0 0.0
    %223 = vmatprep.mubr.f32.mxu0 0.0
    %224 = vmatmul.mubr.f32.gmra.mrb[0].mxu0 %v40
    %v225 = vpop.f32.mrb[0].mxu0
    %v226 = vadd.f32 %v156, %v225
    %v227 = vpop.f32.mrb[0].mxu0
    %228 = vdwg.mxu0
    %p229 = scmp.eq.s32.totalorder 0, 0
    // Predicated region
    $region18: #{tpu_custom_call.1} parent=1 // pred_check
      %p230 = pneg %p229
    $region19: #{tpu_custom_call.1} parent=1 // pred_check_branch
      %232 = sbr.rel (%p230) target = $region21
    $region20: #{tpu_custom_call.1} parent=1 // pred_region
      %233 = vst [vmem:[#allocation7] sm:$0xff] %v226
    $region21: #{tpu_custom_call.1} parent=1 // pred_fallthru
      _
    %p234 = scmp.gt.s32.totalorder 0, 0
    // Predicated region
    $region22: #{tpu_custom_call.1} parent=1 // pred_check
      %p235 = pneg %p234
    $region23: #{tpu_custom_call.1} parent=1 // pred_check_branch
      %237 = sbr.rel (%p235) target = $region25
    $region24: #{tpu_custom_call.1} parent=1 // pred_region
      %v238 = vld [vmem:[#allocation7] sm:$0xff]
      %v239 = vadd.f32 %v238, %v226
      %240 = vst [vmem:[#allocation7] sm:$0xff] %v239
    $region25: #{tpu_custom_call.1} parent=1 // pred_fallthru
      _
    // Predicated region
    $region26: #{tpu_custom_call.1} parent=1 // pred_check
      _
    $region27: #{tpu_custom_call.1} parent=1 // pred_check_branch
      %242 = sbr.rel (0) target = $region29
    $region28: #{tpu_custom_call.1} parent=1 // pred_region
      %s244 = ssub.s32 128, 128
      %245 = vsyncadd [#allocation4], %s244
      %s247 = sshll.u32 [#allocation7], 4
      %s248 = int_to_ptr.vmem [resolvable:$true] %s247
      %250 = dma.vmem_to_hbm [thread:$0]  %s248, 128, %s2, [#allocation4]
    $region29: #{tpu_custom_call.1} parent=1 // pred_fallthru
      _
    // Predicated region
    $region30: #{tpu_custom_call.1} parent=1 // pred_check
      _
    $region31: #{tpu_custom_call.1} parent=1 // pred_check_branch
      %252 = sbr.rel (0) target = $region33
    $region32: #{tpu_custom_call.1} parent=1 // pred_region
      %253 = dma.done [#allocation4], 128
    $region33: #{tpu_custom_call.1} parent=1 // pred_fallthru
      _
    %254 = vsyncpa [#allocation3], 1
    %255 = vsyncpa [#allocation6], 1
    %256 = vsyncpa [#allocation4], 1

</llo_original>
